<compile_context>
chip_gen: v7x
topology: tpu7x:2x2x1
jax: 0.10.0
libtpu: 0.0.40
codegen_flags: <defaults>
</compile_context>

<pallas_src>
import jax
import jax.numpy as jnp
from jax.experimental import pallas as pl
from jax.experimental.pallas import tpu as pltpu

IN_FEATURES = 1568
HIDDEN = 128
LATENT = 32


def encoder_kernel(x_ref, w1_ref, b1_ref, w2_ref, b2_ref, out_ref):
    # fc1: cast x to bf16 in-kernel (saves a wrapper HBM pass), bf16 x bf16
    # matmul with f32 accumulation on the MXU.
    x = x_ref[...].astype(jnp.bfloat16)                       # (TM, 1568)
    h = jnp.dot(x, w1_ref[...], preferred_element_type=jnp.float32)
    h = jax.nn.sigmoid(h + b1_ref[...])                       # (TM,128)+(1,128) f32
    # fc2: bf16 matmul (f32 MXU matmuls are non-native), f32 accumulation.
    o = jnp.dot(h.astype(jnp.bfloat16), w2_ref[...],
                preferred_element_type=jnp.float32)
    o = jax.nn.sigmoid(o + b2_ref[...])                       # (TM,32)+(1,32) f32
    out_ref[...] = o.astype(out_ref.dtype)


def prepare_params(w1, b1, w2, b2):
    """One-time weight prep: cast matmul weights to bf16, keep biases f32."""
    w1_p = w1.astype(jnp.bfloat16)          # (1568, 128)
    b1_p = b1.astype(jnp.float32)           # (1, 128)
    w2_p = w2.astype(jnp.bfloat16)          # (128, latent)
    b2_p = b2.astype(jnp.float32)           # (1, latent)
    return w1_p, b1_p, w2_p, b2_p


def _pick_tile(B):
    # Sublane granularity is 8 rows.  For B > 8 aim for >= 2 grid steps so the
    # "parallel" batch axis lands work on both of v7x's TensorCores; cap at
    # 512 rows so a double-buffered f32 x tile (~6 MiB) fits v5e's 16 MiB
    # default scoped VMEM.
    if B <= 8:
        return 8
    half = -(-B // 2)                       # ceil(B / 2)
    return min(512, ((half + 7) // 8) * 8)


def encoder_forward(x, prepared):
    w1_p, b1_p, w2_p, b2_p = prepared
    B, K = x.shape
    latent = w2_p.shape[1]                  # static (array shape) under jit
    TM = _pick_tile(B)
    grid = (pl.cdiv(B, TM),)                # ragged last block handled by Pallas

    cost = pl.CostEstimate(
        flops=2 * B * K * HIDDEN + 2 * B * HIDDEN * latent,
        transcendentals=B * (HIDDEN + latent),
        bytes_accessed=(x.size * 4 + w1_p.size * 2 + b1_p.size * 4
                        + w2_p.size * 2 + b2_p.size * 4 + B * latent * 4),
    )

    out = pl.pallas_call(
        encoder_kernel,
        out_shape=jax.ShapeDtypeStruct((B, latent), jnp.float32),
        grid_spec=pltpu.PrefetchScalarGridSpec(
            num_scalar_prefetch=0,
            grid=grid,
            in_specs=[
                pl.BlockSpec((TM, K), lambda i: (i, 0)),          # x tile (f32)
                pl.BlockSpec((K, HIDDEN), lambda i: (0, 0)),      # w1 resident (bf16)
                pl.BlockSpec((1, HIDDEN), lambda i: (0, 0)),      # b1 resident (f32)
                pl.BlockSpec((HIDDEN, latent), lambda i: (0, 0)), # w2 resident (bf16)
                pl.BlockSpec((1, latent), lambda i: (0, 0)),      # b2 resident (f32)
            ],
            out_specs=pl.BlockSpec((TM, latent), lambda i: (i, 0)),
        ),
        compiler_params=pltpu.CompilerParams(
            dimension_semantics=("parallel",),   # shards batch across v7x's 2 TCs
        ),
        cost_estimate=cost,
    )(x, w1_p, b1_p, w2_p, b2_p)

    return out


def init_params(key, latent_size=LATENT):
    # Deterministic init mimicking nn.Linear's U(-1/sqrt(fan_in), 1/sqrt(fan_in)).
    k1, k2, k3, k4 = jax.random.split(key, 4)
    lim1 = 1.0 / jnp.sqrt(IN_FEATURES)
    lim2 = 1.0 / jnp.sqrt(HIDDEN)
    w1 = jax.random.uniform(k1, (IN_FEATURES, HIDDEN), jnp.float32, -lim1, lim1)
    b1 = jax.random.uniform(k2, (1, HIDDEN), jnp.float32, -lim1, lim1)
    w2 = jax.random.uniform(k3, (HIDDEN, latent_size), jnp.float32, -lim2, lim2)
    b2 = jax.random.uniform(k4, (1, latent_size), jnp.float32, -lim2, lim2)
    return w1, b1, w2, b2


if __name__ == "__main__":
    key = jax.random.PRNGKey(0)
    kx, kp = jax.random.split(key)
    B = 8
    x = jax.random.normal(kx, (B, IN_FEATURES), jnp.float32)
    w1, b1, w2, b2 = init_params(kp, LATENT)

    prepared = prepare_params(w1, b1, w2, b2)   # one-time bf16 cast of weights
    fwd = jax.jit(encoder_forward)

    out = fwd(x, prepared)
    out = jax.block_until_ready(out)

    # Pure-JAX f32 reference (relaxed tolerance: x/w1/w2 are bf16 in the kernel).
    ref = jax.nn.sigmoid(jax.nn.sigmoid(x @ w1 + b1) @ w2 + b2)
    assert out.shape == (B, LATENT), out.shape
    assert jnp.allclose(out, ref, atol=2e-2), "mismatch vs reference"
    print("KERNEL_OK")
</pallas_src>

<mosaic_0001>
module attributes {stable_mosaic.version = 11 : i64} {
  func.func @encoder_kernel(%arg0: i32, %arg1: memref<8x1568xf32, #tpu.memory_space<vmem>>, %arg2: memref<1568x128xbf16, #tpu.memory_space<vmem>>, %arg3: memref<1x128xf32, #tpu.memory_space<vmem>>, %arg4: memref<128x32xbf16, #tpu.memory_space<vmem>>, %arg5: memref<1x32xf32, #tpu.memory_space<vmem>>, %arg6: memref<8x32xf32, #tpu.memory_space<vmem>>) attributes {dimension_semantics = [#tpu.dimension_semantics<parallel>], iteration_bounds = array<i64: 1>, scalar_prefetch = 0 : i64, scratch_operands = 0 : i64, tpu.core_type = #tpu.core_type<tc>, window_params = [{transform_indices = @transform_0, window_bounds = array<i64: 8, 1568>}, {pipeline_mode = #tpu.pipeline_mode<synchronous>, transform_indices = @transform_1, window_bounds = array<i64: 1568, 128>}, {pipeline_mode = #tpu.pipeline_mode<synchronous>, transform_indices = @transform_2, window_bounds = array<i64: 1, 128>}, {pipeline_mode = #tpu.pipeline_mode<synchronous>, transform_indices = @transform_3, window_bounds = array<i64: 128, 32>}, {pipeline_mode = #tpu.pipeline_mode<synchronous>, transform_indices = @transform_4, window_bounds = array<i64: 1, 32>}, {transform_indices = @transform_5, window_bounds = array<i64: 8, 32>}]} {
    %c0 = arith.constant 0 : index
    %c0_0 = arith.constant 0 : index
    %0 = vector.load %arg1[%c0, %c0_0] : memref<8x1568xf32, #tpu.memory_space<vmem>>, vector<8x1568xf32>
    %1 = arith.truncf %0 : vector<8x1568xf32> to vector<8x1568xbf16>
    %c0_1 = arith.constant 0 : index
    %c0_2 = arith.constant 0 : index
    %2 = vector.load %arg2[%c0_1, %c0_2] : memref<1568x128xbf16, #tpu.memory_space<vmem>>, vector<1568x128xbf16>
    %cst = arith.constant dense<0.000000e+00> : vector<8x128xf32>
    %3 = tpu.matmul %1, %2, %cst {dimension_numbers = #tpu.dot_dimension_numbers<[1], [0], [0], [1], [0, 0, 1, 1], [], []>} : vector<8x1568xbf16>, vector<1568x128xbf16>, vector<8x128xf32> -> vector<8x128xf32>
    %c0_3 = arith.constant 0 : index
    %c0_4 = arith.constant 0 : index
    %4 = vector.load %arg3[%c0_3, %c0_4] : memref<1x128xf32, #tpu.memory_space<vmem>>, vector<1x128xf32>
    %5 = vector.broadcast %4 : vector<1x128xf32> to vector<8x128xf32>
    %6 = arith.addf %3, %5 : vector<8x128xf32>
    %7 = arith.negf %6 : vector<8x128xf32>
    %8 = math.exp %7 : vector<8x128xf32>
    %cst_5 = arith.constant 1.000000e+00 : f32
    %9 = vector.broadcast %cst_5 : f32 to vector<8x128xf32>
    %10 = arith.addf %9, %8 : vector<8x128xf32>
    %11 = arith.divf %9, %10 : vector<8x128xf32>
    %12 = arith.truncf %11 : vector<8x128xf32> to vector<8x128xbf16>
    %c0_6 = arith.constant 0 : index
    %c0_7 = arith.constant 0 : index
    %13 = vector.load %arg4[%c0_6, %c0_7] : memref<128x32xbf16, #tpu.memory_space<vmem>>, vector<128x32xbf16>
    %cst_8 = arith.constant dense<0.000000e+00> : vector<8x32xf32>
    %14 = tpu.matmul %12, %13, %cst_8 {dimension_numbers = #tpu.dot_dimension_numbers<[1], [0], [0], [1], [0, 0, 1, 1], [], []>} : vector<8x128xbf16>, vector<128x32xbf16>, vector<8x32xf32> -> vector<8x32xf32>
    %c0_9 = arith.constant 0 : index
    %c0_10 = arith.constant 0 : index
    %15 = vector.load %arg5[%c0_9, %c0_10] : memref<1x32xf32, #tpu.memory_space<vmem>>, vector<1x32xf32>
    %16 = vector.broadcast %15 : vector<1x32xf32> to vector<8x32xf32>
    %17 = arith.addf %14, %16 : vector<8x32xf32>
    %18 = arith.negf %17 : vector<8x32xf32>
    %19 = math.exp %18 : vector<8x32xf32>
    %cst_11 = arith.constant 1.000000e+00 : f32
    %20 = vector.broadcast %cst_11 : f32 to vector<8x32xf32>
    %21 = arith.addf %20, %19 : vector<8x32xf32>
    %22 = arith.divf %20, %21 : vector<8x32xf32>
    %c0_12 = arith.constant 0 : index
    %c0_13 = arith.constant 0 : index
    %23 = vector.load %arg6[%c0_12, %c0_13] : memref<8x32xf32, #tpu.memory_space<vmem>>, vector<8x32xf32>
    tpu.vector_store %arg6[%c0_12, %c0_13], %22 {strides = array<i32>} : memref<8x32xf32, #tpu.memory_space<vmem>>, vector<8x32xf32>,
    return
  }
  func.func @transform_0(%arg0: i32) -> (i32, i32) {
    %c0_i32 = arith.constant 0 : i32
    %c0_i32_0 = arith.constant 0 : i32
    return %arg0, %c0_i32 : i32, i32
  }
  func.func @transform_1(%arg0: i32) -> (i32, i32) {
    %c0_i32 = arith.constant 0 : i32
    %c0_i32_0 = arith.constant 0 : i32
    %c0_i32_1 = arith.constant 0 : i32
    return %c0_i32, %c0_i32_0 : i32, i32
  }
  func.func @transform_2(%arg0: i32) -> (i32, i32) {
    %c0_i32 = arith.constant 0 : i32
    %c0_i32_0 = arith.constant 0 : i32
    %c0_i32_1 = arith.constant 0 : i32
    return %c0_i32, %c0_i32_0 : i32, i32
  }
  func.func @transform_3(%arg0: i32) -> (i32, i32) {
    %c0_i32 = arith.constant 0 : i32
    %c0_i32_0 = arith.constant 0 : i32
    %c0_i32_1 = arith.constant 0 : i32
    return %c0_i32, %c0_i32_0 : i32, i32
  }
  func.func @transform_4(%arg0: i32) -> (i32, i32) {
    %c0_i32 = arith.constant 0 : i32
    %c0_i32_0 = arith.constant 0 : i32
    %c0_i32_1 = arith.constant 0 : i32
    return %c0_i32, %c0_i32_0 : i32, i32
  }
  func.func @transform_5(%arg0: i32) -> (i32, i32) {
    %c0_i32 = arith.constant 0 : i32
    %c0_i32_0 = arith.constant 0 : i32
    return %arg0, %c0_i32 : i32, i32
  }
}

</mosaic_0001>

<llo_original>
// kernel: encoder_forward.1
$region0: #{encoder_forward.1}
  #allocation0 [shape = 'u32[]', space=smem, size = 0x4, offset = 0x4, fixed_abs, tag = 'smem constant byte address 0x4 - core index']
  #allocation1 [shape = 'u32[144,128]{1,0:T(1,128)}', space=vmem, size = 0x12000, scoped, tag = 'internal scratch']
  %s0 = inlined_call_operand.hbm [shape: f32[8,1568], index: 0, kind: input, shape index: {}]
  %s1 = inlined_call_operand.hbm [shape: bf16[1568,128], index: 1, kind: input, shape index: {}]
  %s2 = inlined_call_operand.vmem [shape: f32[1,128], index: 2, kind: input, shape index: {}]
  %s3 = inlined_call_operand.vmem [shape: bf16[128,32], index: 3, kind: input, shape index: {}]
  %s4 = inlined_call_operand.vmem [shape: f32[1,32], index: 4, kind: input, shape index: {}]
  %s5 = inlined_call_operand.hbm [shape: f32[8,32], index: 5, kind: output, shape index: {}]
  %s6 = sld [smem:[#allocation0]]
  $region38: #{encoder_forward.1} parent=0
    _
  %s8 = ssub.s32 1, %s6
  %s9 = scalar_select 0, %s8, %s6
  $region1: #{encoder_forward.1} parent=0
    #allocation2 [shape = 'u8[53248]{0}', space=vmem, size = 0xd000, scoped, tag = 'input window, operand 0, single buffered']
    #allocation3 [shape = 's32[1]{0}', space=sflag, size = 0x4, scoped, tag = 'scoped memory for encoder_forward.1']
    #allocation4 [shape = 's32[1]{0}', space=sflag, size = 0x4, scoped, tag = 'scoped memory for encoder_forward.1']
    #allocation5 [shape = 'u8[401408]{0}', space=vmem, size = 0x62000, scoped, tag = 'input window, operand 1, single buffered']
    #allocation6 [shape = 's32[1]{0}', space=sflag, size = 0x4, scoped, tag = 'scoped memory for encoder_forward.1']
    #allocation7 [shape = 'u8[4096]{0}', space=vmem, size = 0x1000, scoped, tag = 'output window, operand 0, single buffered']
    %10 = vsyncpa [#allocation3], 0
    %11 = vsyncpa [#allocation6], 0
    %12 = vsyncpa [#allocation4], 0
    // Predicated region
    $region2: #{encoder_forward.1} parent=1 // pred_check
      _
    $region3: #{encoder_forward.1} parent=1 // pred_check_branch
      %14 = sbr.rel (0) target = $region5
    $region4: #{encoder_forward.1} parent=1 // pred_region
      %s16 = ssub.s32 1664, 1664
      %17 = vsyncadd [#allocation3], %s16
      %s19 = sshll.u32 [#allocation2], 4
      %s20 = int_to_ptr.vmem [resolvable:$true] %s19
      %22 = dma.hbm_to_vmem [thread:$0]  %s0, 1664, %s20, [#allocation3]
    $region5: #{encoder_forward.1} parent=1 // pred_fallthru
      _
    // Predicated region
    $region6: #{encoder_forward.1} parent=1 // pred_check
      _
    $region7: #{encoder_forward.1} parent=1 // pred_check_branch
      %24 = sbr.rel (0) target = $region9
    $region8: #{encoder_forward.1} parent=1 // pred_region
      %s26 = ssub.s32 12544, 12544
      %27 = vsyncadd [#allocation6], %s26
      %s28 = sshll.u32 [#allocation5], 4
      %s29 = int_to_ptr.vmem [resolvable:$true] %s28
      %34 = dma.hbm_to_vmem [thread:$0]  %s1, 12544, %s29, [#allocation6], 64, 64, 4
    $region9: #{encoder_forward.1} parent=1 // pred_fallthru
      _
    // Predicated region
    $region10: #{encoder_forward.1} parent=1 // pred_check
      _
    $region11: #{encoder_forward.1} parent=1 // pred_check_branch
      %36 = sbr.rel (0) target = $region13
    $region12: #{encoder_forward.1} parent=1 // pred_region
      _
    $region13: #{encoder_forward.1} parent=1 // pred_fallthru
      _
    // Predicated region
    $region14: #{encoder_forward.1} parent=1 // pred_check
      _
    $region15: #{encoder_forward.1} parent=1 // pred_check_branch
      %38 = sbr.rel (0) target = $region17
    $region16: #{encoder_forward.1} parent=1 // pred_region
      _
    $region17: #{encoder_forward.1} parent=1 // pred_fallthru
      _
    // Predicated region
    $region18: #{encoder_forward.1} parent=1 // pred_check
      _
    $region19: #{encoder_forward.1} parent=1 // pred_check_branch
      %40 = sbr.rel (0) target = $region21
    $region20: #{encoder_forward.1} parent=1 // pred_region
      _
    $region21: #{encoder_forward.1} parent=1 // pred_fallthru
      _
    // Predicated region
    $region22: #{encoder_forward.1} parent=1 // pred_check
      _
    $region23: #{encoder_forward.1} parent=1 // pred_check_branch
      %42 = sbr.rel (0) target = $region25
    $region24: #{encoder_forward.1} parent=1 // pred_region
      %43 = dma.done [#allocation3], 1664
    $region25: #{encoder_forward.1} parent=1 // pred_fallthru
      _
    // Predicated region
    $region26: #{encoder_forward.1} parent=1 // pred_check
      _
    $region27: #{encoder_forward.1} parent=1 // pred_check_branch
      %45 = sbr.rel (0) target = $region29
    $region28: #{encoder_forward.1} parent=1 // pred_region
      %46 = dma.done [#allocation6], 12544
    $region29: #{encoder_forward.1} parent=1 // pred_fallthru
      _
    %v48 = vld [vmem:[#allocation2] sm:$0xff]
    %v49 = vld [vmem:[#allocation2 + $0x8] sm:$0xff]
    %v50 = vld [vmem:[#allocation2 + $0x10] sm:$0xff]
    %v51 = vld [vmem:[#allocation2 + $0x18] sm:$0xff]
    %v52 = vld [vmem:[#allocation2 + $0x20] sm:$0xff]
    %v53 = vld [vmem:[#allocation2 + $0x28] sm:$0xff]
    %v54 = vld [vmem:[#allocation2 + $0x30] sm:$0xff]
    %v55 = vld [vmem:[#allocation2 + $0x38] sm:$0xff]
    %v56 = vld [vmem:[#allocation2 + $0x40] sm:$0xff]
    %v57 = vld [vmem:[#allocation2 + $0x48] sm:$0xff]
    %v58 = vld [vmem:[#allocation2 + $0x50] sm:$0xff]
    %v59 = vld [vmem:[#allocation2 + $0x58] sm:$0xff]
    %v60 = vld [vmem:[#allocation2 + $0x60] sm:$0xff]
    %v61 = vpack.c.bf16 %v48, %v48
    %v62 = vpack.c.bf16 %v49, %v49
    %v63 = vpack.c.bf16 %v50, %v50
    %v64 = vpack.c.bf16 %v51, %v51
    %v65 = vpack.c.bf16 %v52, %v52
    %v66 = vpack.c.bf16 %v53, %v53
    %v67 = vpack.c.bf16 %v54, %v54
    %v68 = vpack.c.bf16 %v55, %v55
    %v69 = vpack.c.bf16 %v56, %v56
    %v70 = vpack.c.bf16 %v57, %v57
    %v71 = vpack.c.bf16 %v58, %v58
    %v72 = vpack.c.bf16 %v59, %v59
    %v73 = vpack.c.bf16 %v60, %v60
    %v74 = vld [vmem:[#allocation5] sm:$0xf]
    %v75 = vld [vmem:[#allocation5 + $0x4] sm:$0xf]
    %v76 = vld [vmem:[#allocation5 + $0x8] sm:$0xf]
    %v77 = vld [vmem:[#allocation5 + $0xc] sm:$0xf]
    %v78 = vld [vmem:[#allocation5 + $0x10] sm:$0xf]
    %v79 = vld [vmem:[#allocation5 + $0x14] sm:$0xf]
    %v80 = vld [vmem:[#allocation5 + $0x18] sm:$0xf]
    %v81 = vld [vmem:[#allocation5 + $0x1c] sm:$0xf]
    %v82 = vld [vmem:[#allocation5 + $0x20] sm:$0xf]
    %v83 = vld [vmem:[#allocation5 + $0x24] sm:$0xf]
    %v84 = vld [vmem:[#allocation5 + $0x28] sm:$0xf]
    %v85 = vld [vmem:[#allocation5 + $0x2c] sm:$0xf]
    %v86 = vld [vmem:[#allocation5 + $0x30] sm:$0xf]
    %v87 = vld [vmem:[#allocation5 + $0x34] sm:$0xf]
    %v88 = vld [vmem:[#allocation5 + $0x38] sm:$0xf]
    %v89 = vld [vmem:[#allocation5 + $0x3c] sm:$0xf]
    %v90 = vld [vmem:[#allocation5 + $0x40] sm:$0xf]
    %v91 = vld [vmem:[#allocation5 + $0x44] sm:$0xf]
    %v92 = vld [vmem:[#allocation5 + $0x48] sm:$0xf]
    %v93 = vld [vmem:[#allocation5 + $0x4c] sm:$0xf]
    %v94 = vld [vmem:[#allocation5 + $0x50] sm:$0xf]
    %v95 = vld [vmem:[#allocation5 + $0x54] sm:$0xf]
    %v96 = vld [vmem:[#allocation5 + $0x58] sm:$0xf]
    %v97 = vld [vmem:[#allocation5 + $0x5c] sm:$0xf]
    %v98 = vld [vmem:[#allocation5 + $0x60] sm:$0xf]
    %v99 = vld [vmem:[#allocation5 + $0x64] sm:$0xf]
    %v100 = vld [vmem:[#allocation5 + $0x68] sm:$0xf]
    %v101 = vld [vmem:[#allocation5 + $0x6c] sm:$0xf]
    %v102 = vld [vmem:[#allocation5 + $0x70] sm:$0xf]
    %v103 = vld [vmem:[#allocation5 + $0x74] sm:$0xf]
    %v104 = vld [vmem:[#allocation5 + $0x78] sm:$0xf]
    %v105 = vld [vmem:[#allocation5 + $0x7c] sm:$0xf]
    %v106 = vld [vmem:[#allocation5 + $0x80] sm:$0xf]
    %v107 = vld [vmem:[#allocation5 + $0x84] sm:$0xf]
    %v108 = vld [vmem:[#allocation5 + $0x88] sm:$0xf]
    %v109 = vld [vmem:[#allocation5 + $0x8c] sm:$0xf]
    %v110 = vld [vmem:[#allocation5 + $0x90] sm:$0xf]
    %v111 = vld [vmem:[#allocation5 + $0x94] sm:$0xf]
    %v112 = vld [vmem:[#allocation5 + $0x98] sm:$0xf]
    %v113 = vld [vmem:[#allocation5 + $0x9c] sm:$0xf]
    %v114 = vld [vmem:[#allocation5 + $0xa0] sm:$0xf]
    %v115 = vld [vmem:[#allocation5 + $0xa4] sm:$0xf]
    %v116 = vld [vmem:[#allocation5 + $0xa8] sm:$0xf]
    %v117 = vld [vmem:[#allocation5 + $0xac] sm:$0xf]
    %v118 = vld [vmem:[#allocation5 + $0xb0] sm:$0xf]
    %v119 = vld [vmem:[#allocation5 + $0xb4] sm:$0xf]
    %v120 = vld [vmem:[#allocation5 + $0xb8] sm:$0xf]
    %v121 = vld [vmem:[#allocation5 + $0xbc] sm:$0xf]
    %v122 = vld [vmem:[#allocation5 + $0xc0] sm:$0xf]
    %v123 = vld [vmem:[#allocation5 + $0xc4] sm:$0xf]
    %v124 = vld [vmem:[#allocation5 + $0xc8] sm:$0xf]
    %v125 = vld [vmem:[#allocation5 + $0xcc] sm:$0xf]
    %v126 = vld [vmem:[#allocation5 + $0xd0] sm:$0xf]
    %v127 = vld [vmem:[#allocation5 + $0xd4] sm:$0xf]
    %v128 = vld [vmem:[#allocation5 + $0xd8] sm:$0xf]
    %v129 = vld [vmem:[#allocation5 + $0xdc] sm:$0xf]
    %v130 = vld [vmem:[#allocation5 + $0xe0] sm:$0xf]
    %v131 = vld [vmem:[#allocation5 + $0xe4] sm:$0xf]
    %v132 = vld [vmem:[#allocation5 + $0xe8] sm:$0xf]
    %v133 = vld [vmem:[#allocation5 + $0xec] sm:$0xf]
    %v134 = vld [vmem:[#allocation5 + $0xf0] sm:$0xf]
    %v135 = vld [vmem:[#allocation5 + $0xf4] sm:$0xf]
    %v136 = vld [vmem:[#allocation5 + $0xf8] sm:$0xf]
    %v137 = vld [vmem:[#allocation5 + $0xfc] sm:$0xf]
    %v138 = vld [vmem:[#allocation5 + $0x100] sm:$0xf]
    %v139 = vld [vmem:[#allocation5 + $0x104] sm:$0xf]
    %v140 = vld [vmem:[#allocation5 + $0x108] sm:$0xf]
    %v141 = vld [vmem:[#allocation5 + $0x10c] sm:$0xf]
    %v142 = vld [vmem:[#allocation5 + $0x110] sm:$0xf]
    %v143 = vld [vmem:[#allocation5 + $0x114] sm:$0xf]
    %v144 = vld [vmem:[#allocation5 + $0x118] sm:$0xf]
    %v145 = vld [vmem:[#allocation5 + $0x11c] sm:$0xf]
    %v146 = vld [vmem:[#allocation5 + $0x120] sm:$0xf]
    %v147 = vld [vmem:[#allocation5 + $0x124] sm:$0xf]
    %v148 = vld [vmem:[#allocation5 + $0x128] sm:$0xf]
    %v149 = vld [vmem:[#allocation5 + $0x12c] sm:$0xf]
    %v150 = vld [vmem:[#allocation5 + $0x130] sm:$0xf]
    %v151 = vld [vmem:[#allocation5 + $0x134] sm:$0xf]
    %v152 = vld [vmem:[#allocation5 + $0x138] sm:$0xf]
    %v153 = vld [vmem:[#allocation5 + $0x13c] sm:$0xf]
    %v154 = vld [vmem:[#allocation5 + $0x140] sm:$0xf]
    %v155 = vld [vmem:[#allocation5 + $0x144] sm:$0xf]
    %v156 = vld [vmem:[#allocation5 + $0x148] sm:$0xf]
    %v157 = vld [vmem:[#allocation5 + $0x14c] sm:$0xf]
    %v158 = vld [vmem:[#allocation5 + $0x150] sm:$0xf]
    %v159 = vld [vmem:[#allocation5 + $0x154] sm:$0xf]
    %v160 = vld [vmem:[#allocation5 + $0x158] sm:$0xf]
    %v161 = vld [vmem:[#allocation5 + $0x15c] sm:$0xf]
    %v162 = vld [vmem:[#allocation5 + $0x160] sm:$0xf]
    %v163 = vld [vmem:[#allocation5 + $0x164] sm:$0xf]
    %v164 = vld [vmem:[#allocation5 + $0x168] sm:$0xf]
    %v165 = vld [vmem:[#allocation5 + $0x16c] sm:$0xf]
    %v166 = vld [vmem:[#allocation5 + $0x170] sm:$0xf]
    %v167 = vld [vmem:[#allocation5 + $0x174] sm:$0xf]
    %v168 = vld [vmem:[#allocation5 + $0x178] sm:$0xf]
    %v169 = vld [vmem:[#allocation5 + $0x17c] sm:$0xf]
    %v170 = vld [vmem:[#allocation5 + $0x180] sm:$0xf]
    %v171 = vld [vmem:[#allocation5 + $0x184] sm:$0xf]
    %v172 = vld [vmem:[#allocation5 + $0x188] sm:$0xf]
    %v173 = vld [vmem:[#allocation5 + $0x18c] sm:$0xf]
    %v174 = vld [vmem:[#allocation5 + $0x190] sm:$0xf]
    %v175 = vld [vmem:[#allocation5 + $0x194] sm:$0xf]
    %v176 = vld [vmem:[#allocation5 + $0x198] sm:$0xf]
    %v177 = vld [vmem:[#allocation5 + $0x19c] sm:$0xf]
    %v178 = vld [vmem:[#allocation5 + $0x1a0] sm:$0xf]
    %v179 = vld [vmem:[#allocation5 + $0x1a4] sm:$0xf]
    %v180 = vld [vmem:[#allocation5 + $0x1a8] sm:$0xf]
    %v181 = vld [vmem:[#allocation5 + $0x1ac] sm:$0xf]
    %v182 = vld [vmem:[#allocation5 + $0x1b0] sm:$0xf]
    %v183 = vld [vmem:[#allocation5 + $0x1b4] sm:$0xf]
    %v184 = vld [vmem:[#allocation5 + $0x1b8] sm:$0xf]
    %v185 = vld [vmem:[#allocation5 + $0x1bc] sm:$0xf]
    %v186 = vld [vmem:[#allocation5 + $0x1c0] sm:$0xf]
    %v187 = vld [vmem:[#allocation5 + $0x1c4] sm:$0xf]
    %v188 = vld [vmem:[#allocation5 + $0x1c8] sm:$0xf]
    %v189 = vld [vmem:[#allocation5 + $0x1cc] sm:$0xf]
    %v190 = vld [vmem:[#allocation5 + $0x1d0] sm:$0xf]
    %v191 = vld [vmem:[#allocation5 + $0x1d4] sm:$0xf]
    %v192 = vld [vmem:[#allocation5 + $0x1d8] sm:$0xf]
    %v193 = vld [vmem:[#allocation5 + $0x1dc] sm:$0xf]
    %v194 = vld [vmem:[#allocation5 + $0x1e0] sm:$0xf]
    %v195 = vld [vmem:[#allocation5 + $0x1e4] sm:$0xf]
    %v196 = vld [vmem:[#allocation5 + $0x1e8] sm:$0xf]
    %v197 = vld [vmem:[#allocation5 + $0x1ec] sm:$0xf]
    %v198 = vld [vmem:[#allocation5 + $0x1f0] sm:$0xf]
    %v199 = vld [vmem:[#allocation5 + $0x1f4] sm:$0xf]
    %v200 = vld [vmem:[#allocation5 + $0x1f8] sm:$0xf]
    %v201 = vld [vmem:[#allocation5 + $0x1fc] sm:$0xf]
    %v202 = vld [vmem:[#allocation5 + $0x200] sm:$0xf]
    %v203 = vld [vmem:[#allocation5 + $0x204] sm:$0xf]
    %v204 = vld [vmem:[#allocation5 + $0x208] sm:$0xf]
    %v205 = vld [vmem:[#allocation5 + $0x20c] sm:$0xf]
    %v206 = vld [vmem:[#allocation5 + $0x210] sm:$0xf]
    %v207 = vld [vmem:[#allocation5 + $0x214] sm:$0xf]
    %v208 = vld [vmem:[#allocation5 + $0x218] sm:$0xf]
    %v209 = vld [vmem:[#allocation5 + $0x21c] sm:$0xf]
    %v210 = vld [vmem:[#allocation5 + $0x220] sm:$0xf]
    %v211 = vld [vmem:[#allocation5 + $0x224] sm:$0xf]
    %v212 = vld [vmem:[#allocation5 + $0x228] sm:$0xf]
    %v213 = vld [vmem:[#allocation5 + $0x22c] sm:$0xf]
    %v214 = vld [vmem:[#allocation5 + $0x230] sm:$0xf]
    %v215 = vld [vmem:[#allocation5 + $0x234] sm:$0xf]
    %v216 = vld [vmem:[#allocation5 + $0x238] sm:$0xf]
    %v217 = vld [vmem:[#allocation5 + $0x23c] sm:$0xf]
    %v218 = vld [vmem:[#allocation5 + $0x240] sm:$0xf]
    %v219 = vld [vmem:[#allocation5 + $0x244] sm:$0xf]
    %v220 = vld [vmem:[#allocation5 + $0x248] sm:$0xf]
    %v221 = vld [vmem:[#allocation5 + $0x24c] sm:$0xf]
    %v222 = vld [vmem:[#allocation5 + $0x250] sm:$0xf]
    %v223 = vld [vmem:[#allocation5 + $0x254] sm:$0xf]
    %v224 = vld [vmem:[#allocation5 + $0x258] sm:$0xf]
    %v225 = vld [vmem:[#allocation5 + $0x25c] sm:$0xf]
    %v226 = vld [vmem:[#allocation5 + $0x260] sm:$0xf]
    %v227 = vld [vmem:[#allocation5 + $0x264] sm:$0xf]
    %v228 = vld [vmem:[#allocation5 + $0x268] sm:$0xf]
    %v229 = vld [vmem:[#allocation5 + $0x26c] sm:$0xf]
    %v230 = vld [vmem:[#allocation5 + $0x270] sm:$0xf]
    %v231 = vld [vmem:[#allocation5 + $0x274] sm:$0xf]
    %v232 = vld [vmem:[#allocation5 + $0x278] sm:$0xf]
    %v233 = vld [vmem:[#allocation5 + $0x27c] sm:$0xf]
    %v234 = vld [vmem:[#allocation5 + $0x280] sm:$0xf]
    %v235 = vld [vmem:[#allocation5 + $0x284] sm:$0xf]
    %v236 = vld [vmem:[#allocation5 + $0x288] sm:$0xf]
    %v237 = vld [vmem:[#allocation5 + $0x28c] sm:$0xf]
    %v238 = vld [vmem:[#allocation5 + $0x290] sm:$0xf]
    %v239 = vld [vmem:[#allocation5 + $0x294] sm:$0xf]
    %v240 = vld [vmem:[#allocation5 + $0x298] sm:$0xf]
    %v241 = vld [vmem:[#allocation5 + $0x29c] sm:$0xf]
    %v242 = vld [vmem:[#allocation5 + $0x2a0] sm:$0xf]
    %v243 = vld [vmem:[#allocation5 + $0x2a4] sm:$0xf]
    %v244 = vld [vmem:[#allocation5 + $0x2a8] sm:$0xf]
    %v245 = vld [vmem:[#allocation5 + $0x2ac] sm:$0xf]
    %v246 = vld [vmem:[#allocation5 + $0x2b0] sm:$0xf]
    %v247 = vld [vmem:[#allocation5 + $0x2b4] sm:$0xf]
    %v248 = vld [vmem:[#allocation5 + $0x2b8] sm:$0xf]
    %v249 = vld [vmem:[#allocation5 + $0x2bc] sm:$0xf]
    %v250 = vld [vmem:[#allocation5 + $0x2c0] sm:$0xf]
    %v251 = vld [vmem:[#allocation5 + $0x2c4] sm:$0xf]
    %v252 = vld [vmem:[#allocation5 + $0x2c8] sm:$0xf]
    %v253 = vld [vmem:[#allocation5 + $0x2cc] sm:$0xf]
    %v254 = vld [vmem:[#allocation5 + $0x2d0] sm:$0xf]
    %v255 = vld [vmem:[#allocation5 + $0x2d4] sm:$0xf]
    %v256 = vld [vmem:[#allocation5 + $0x2d8] sm:$0xf]
    %v257 = vld [vmem:[#allocation5 + $0x2dc] sm:$0xf]
    %v258 = vld [vmem:[#allocation5 + $0x2e0] sm:$0xf]
    %v259 = vld [vmem:[#allocation5 + $0x2e4] sm:$0xf]
    %v260 = vld [vmem:[#allocation5 + $0x2e8] sm:$0xf]
    %v261 = vld [vmem:[#allocation5 + $0x2ec] sm:$0xf]
    %v262 = vld [vmem:[#allocation5 + $0x2f0] sm:$0xf]
    %v263 = vld [vmem:[#allocation5 + $0x2f4] sm:$0xf]
    %v264 = vld [vmem:[#allocation5 + $0x2f8] sm:$0xf]
    %v265 = vld [vmem:[#allocation5 + $0x2fc] sm:$0xf]
    %v266 = vld [vmem:[#allocation5 + $0x300] sm:$0xf]
    %v267 = vld [vmem:[#allocation5 + $0x304] sm:$0xf]
    %v268 = vld [vmem:[#allocation5 + $0x308] sm:$0xf]
    %v269 = vld [vmem:[#allocation5 + $0x30c] sm:$0xf]
    %v270 = vld [vmem:[%s2] sm:$0x1]
    %v272 = vlaneseq
    %v273 = vshrl.u32 %v272, 7
    %v274 = vsub.s32 0, %v273
    %v275 = vrot.slane %v270, %v274
    %v473 = vunpack.c.l.b16 %v74
    %v474 = vunpack.c.l.b16 %v75
    %v475 = vunpack.c.l.b16 %v76
    %v476 = vunpack.c.l.b16 %v77
    %v477 = vunpack.c.l.b16 %v78
    %v478 = vunpack.c.l.b16 %v79
    %v479 = vunpack.c.l.b16 %v80
    %v480 = vunpack.c.l.b16 %v81
    %v481 = vunpack.c.l.b16 %v82
    %v482 = vunpack.c.l.b16 %v83
    %v483 = vunpack.c.l.b16 %v84
    %v484 = vunpack.c.l.b16 %v85
    %v485 = vunpack.c.l.b16 %v86
    %v486 = vunpack.c.l.b16 %v87
    %v487 = vunpack.c.l.b16 %v88
    %v488 = vunpack.c.l.b16 %v89
    %v489 = vunpack.c.l.b16 %v90
    %v490 = vunpack.c.l.b16 %v91
    %v491 = vunpack.c.l.b16 %v92
    %v492 = vunpack.c.l.b16 %v93
    %v493 = vunpack.c.l.b16 %v94
    %v494 = vunpack.c.l.b16 %v95
    %v495 = vunpack.c.l.b16 %v96
    %v496 = vunpack.c.l.b16 %v97
    %v497 = vunpack.c.l.b16 %v98
    %v498 = vunpack.c.l.b16 %v99
    %v499 = vunpack.c.l.b16 %v100
    %v500 = vunpack.c.l.b16 %v101
    %v501 = vunpack.c.l.b16 %v102
    %v502 = vunpack.c.l.b16 %v103
    %v503 = vunpack.c.l.b16 %v104
    %v504 = vunpack.c.l.b16 %v105
    %v505 = vunpack.c.l.b16 %v106
    %v506 = vunpack.c.l.b16 %v107
    %v507 = vunpack.c.l.b16 %v108
    %v508 = vunpack.c.l.b16 %v109
    %v509 = vunpack.c.l.b16 %v110
    %v510 = vunpack.c.l.b16 %v111
    %v511 = vunpack.c.l.b16 %v112
    %v512 = vunpack.c.l.b16 %v113
    %v513 = vunpack.c.l.b16 %v114
    %v514 = vunpack.c.l.b16 %v115
    %v515 = vunpack.c.l.b16 %v116
    %v516 = vunpack.c.l.b16 %v117
    %v517 = vunpack.c.l.b16 %v118
    %v518 = vunpack.c.l.b16 %v119
    %v519 = vunpack.c.l.b16 %v120
    %v520 = vunpack.c.l.b16 %v121
    %v521 = vunpack.c.l.b16 %v122
    %v522 = vunpack.c.l.b16 %v123
    %v523 = vunpack.c.l.b16 %v124
    %v524 = vunpack.c.l.b16 %v125
    %v525 = vunpack.c.l.b16 %v126
    %v526 = vunpack.c.l.b16 %v127
    %v527 = vunpack.c.l.b16 %v128
    %v528 = vunpack.c.l.b16 %v129
    %v529 = vunpack.c.l.b16 %v130
    %v530 = vunpack.c.l.b16 %v131
    %v531 = vunpack.c.l.b16 %v132
    %v532 = vunpack.c.l.b16 %v133
    %v533 = vunpack.c.l.b16 %v134
    %v534 = vunpack.c.l.b16 %v135
    %v535 = vunpack.c.l.b16 %v136
    %v536 = vunpack.c.l.b16 %v137
    %v537 = vunpack.c.l.b16 %v138
    %v538 = vunpack.c.l.b16 %v139
    %v539 = vunpack.c.l.b16 %v140
    %v540 = vunpack.c.l.b16 %v141
    %v541 = vunpack.c.l.b16 %v142
    %v542 = vunpack.c.l.b16 %v143
    %v543 = vunpack.c.l.b16 %v144
    %v544 = vunpack.c.l.b16 %v145
    %v545 = vunpack.c.l.b16 %v146
    %v546 = vunpack.c.l.b16 %v147
    %v547 = vunpack.c.l.b16 %v148
    %v548 = vunpack.c.l.b16 %v149
    %v549 = vunpack.c.l.b16 %v150
    %v550 = vunpack.c.l.b16 %v151
    %v551 = vunpack.c.l.b16 %v152
    %v552 = vunpack.c.l.b16 %v153
    %v553 = vunpack.c.l.b16 %v154
    %v554 = vunpack.c.l.b16 %v155
    %v555 = vunpack.c.l.b16 %v156
    %v556 = vunpack.c.l.b16 %v157
    %v557 = vunpack.c.l.b16 %v158
    %v558 = vunpack.c.l.b16 %v159
    %v559 = vunpack.c.l.b16 %v160
    %v560 = vunpack.c.l.b16 %v161
    %v561 = vunpack.c.l.b16 %v162
    %v562 = vunpack.c.l.b16 %v163
    %v563 = vunpack.c.l.b16 %v164
    %v564 = vunpack.c.l.b16 %v165
    %v565 = vunpack.c.l.b16 %v166
    %v566 = vunpack.c.l.b16 %v167
    %v567 = vunpack.c.l.b16 %v168
    %v568 = vunpack.c.l.b16 %v169
    %v569 = vunpack.c.l.b16 %v170
    %v570 = vunpack.c.l.b16 %v171
    %v571 = vunpack.c.l.b16 %v172
    %v572 = vunpack.c.l.b16 %v173
    %v573 = vunpack.c.l.b16 %v174
    %v574 = vunpack.c.l.b16 %v175
    %v575 = vunpack.c.l.b16 %v176
    %v576 = vunpack.c.l.b16 %v177
    %v577 = vunpack.c.l.b16 %v178
    %v578 = vunpack.c.l.b16 %v179
    %v579 = vunpack.c.l.b16 %v180
    %v580 = vunpack.c.l.b16 %v181
    %v581 = vunpack.c.l.b16 %v182
    %v582 = vunpack.c.l.b16 %v183
    %v583 = vunpack.c.l.b16 %v184
    %v584 = vunpack.c.l.b16 %v185
    %v585 = vunpack.c.l.b16 %v186
    %v586 = vunpack.c.l.b16 %v187
    %v587 = vunpack.c.l.b16 %v188
    %v588 = vunpack.c.l.b16 %v189
    %v589 = vunpack.c.l.b16 %v190
    %v590 = vunpack.c.l.b16 %v191
    %v591 = vunpack.c.l.b16 %v192
    %v592 = vunpack.c.l.b16 %v193
    %v593 = vunpack.c.l.b16 %v194
    %v594 = vunpack.c.l.b16 %v195
    %v595 = vunpack.c.l.b16 %v196
    %v596 = vunpack.c.l.b16 %v197
    %v597 = vunpack.c.l.b16 %v198
    %v598 = vunpack.c.l.b16 %v199
    %v599 = vunpack.c.l.b16 %v200
    %v600 = vunpack.c.l.b16 %v201
    %v601 = vunpack.c.l.b16 %v202
    %v602 = vunpack.c.l.b16 %v203
    %v603 = vunpack.c.l.b16 %v204
    %v604 = vunpack.c.l.b16 %v205
    %v605 = vunpack.c.l.b16 %v206
    %v606 = vunpack.c.l.b16 %v207
    %v607 = vunpack.c.l.b16 %v208
    %v608 = vunpack.c.l.b16 %v209
    %v609 = vunpack.c.l.b16 %v210
    %v610 = vunpack.c.l.b16 %v211
    %v611 = vunpack.c.l.b16 %v212
    %v612 = vunpack.c.l.b16 %v213
    %v613 = vunpack.c.l.b16 %v214
    %v614 = vunpack.c.l.b16 %v215
    %v615 = vunpack.c.l.b16 %v216
    %v616 = vunpack.c.l.b16 %v217
    %v617 = vunpack.c.l.b16 %v218
    %v618 = vunpack.c.l.b16 %v219
    %v619 = vunpack.c.l.b16 %v220
    %v620 = vunpack.c.l.b16 %v221
    %v621 = vunpack.c.l.b16 %v222
    %v622 = vunpack.c.l.b16 %v223
    %v623 = vunpack.c.l.b16 %v224
    %v624 = vunpack.c.l.b16 %v225
    %v625 = vunpack.c.l.b16 %v226
    %v626 = vunpack.c.l.b16 %v227
    %v627 = vunpack.c.l.b16 %v228
    %v628 = vunpack.c.l.b16 %v229
    %v629 = vunpack.c.l.b16 %v230
    %v630 = vunpack.c.l.b16 %v231
    %v631 = vunpack.c.l.b16 %v232
    %v632 = vunpack.c.l.b16 %v233
    %v633 = vunpack.c.l.b16 %v234
    %v634 = vunpack.c.l.b16 %v235
    %v635 = vunpack.c.l.b16 %v236
    %v636 = vunpack.c.l.b16 %v237
    %v637 = vunpack.c.l.b16 %v238
    %v638 = vunpack.c.l.b16 %v239
    %v639 = vunpack.c.l.b16 %v240
    %v640 = vunpack.c.l.b16 %v241
    %v641 = vunpack.c.l.b16 %v242
    %v642 = vunpack.c.l.b16 %v243
    %v643 = vunpack.c.l.b16 %v244
    %v644 = vunpack.c.l.b16 %v245
    %v645 = vunpack.c.l.b16 %v246
    %v646 = vunpack.c.l.b16 %v247
    %v647 = vunpack.c.l.b16 %v248
    %v648 = vunpack.c.l.b16 %v249
    %v649 = vunpack.c.l.b16 %v250
    %v650 = vunpack.c.l.b16 %v251
    %v651 = vunpack.c.l.b16 %v252
    %v652 = vunpack.c.l.b16 %v253
    %v653 = vunpack.c.l.b16 %v254
    %v654 = vunpack.c.l.b16 %v255
    %v655 = vunpack.c.l.b16 %v256
    %v656 = vunpack.c.l.b16 %v257
    %v657 = vunpack.c.l.b16 %v258
    %v658 = vunpack.c.l.b16 %v259
    %v659 = vunpack.c.l.b16 %v260
    %v660 = vunpack.c.l.b16 %v261
    %v661 = vunpack.c.l.b16 %v262
    %v662 = vunpack.c.l.b16 %v263
    %v663 = vunpack.c.l.b16 %v264
    %v664 = vunpack.c.l.b16 %v265
    %v665 = vunpack.c.l.b16 %v266
    %v666 = vunpack.c.l.b16 %v267
    %v667 = vunpack.c.l.b16 %v268
    %v668 = vunpack.c.l.b16 %v269
    %v669 = vpack.c.b16 %v474, %v473
    %v670 = vpack.c.b16 %v476, %v475
    %v671 = vpack.c.b16 %v478, %v477
    %v672 = vpack.c.b16 %v480, %v479
    %v673 = vpack.c.b16 %v482, %v481
    %v674 = vpack.c.b16 %v484, %v483
    %v675 = vpack.c.b16 %v486, %v485
    %v676 = vpack.c.b16 %v488, %v487
    %v677 = vpack.c.b16 %v490, %v489
    %v678 = vpack.c.b16 %v492, %v491
    %v679 = vpack.c.b16 %v494, %v493
    %v680 = vpack.c.b16 %v496, %v495
    %v681 = vpack.c.b16 %v498, %v497
    %v682 = vpack.c.b16 %v500, %v499
    %v683 = vpack.c.b16 %v502, %v501
    %v684 = vpack.c.b16 %v504, %v503
    %v685 = vpack.c.b16 %v506, %v505
    %v686 = vpack.c.b16 %v508, %v507
    %v687 = vpack.c.b16 %v510, %v509
    %v688 = vpack.c.b16 %v512, %v511
    %v689 = vpack.c.b16 %v514, %v513
    %v690 = vpack.c.b16 %v516, %v515
    %v691 = vpack.c.b16 %v518, %v517
    %v692 = vpack.c.b16 %v520, %v519
    %v693 = vpack.c.b16 %v522, %v521
    %v694 = vpack.c.b16 %v524, %v523
    %v695 = vpack.c.b16 %v526, %v525
    %v696 = vpack.c.b16 %v528, %v527
    %v697 = vpack.c.b16 %v530, %v529
    %v698 = vpack.c.b16 %v532, %v531
    %v699 = vpack.c.b16 %v534, %v533
    %v700 = vpack.c.b16 %v536, %v535
    %v701 = vpack.c.b16 %v538, %v537
    %v702 = vpack.c.b16 %v540, %v539
    %v703 = vpack.c.b16 %v542, %v541
    %v704 = vpack.c.b16 %v544, %v543
    %v705 = vpack.c.b16 %v546, %v545
    %v706 = vpack.c.b16 %v548, %v547
    %v707 = vpack.c.b16 %v550, %v549
    %v708 = vpack.c.b16 %v552, %v551
    %v709 = vpack.c.b16 %v554, %v553
    %v710 = vpack.c.b16 %v556, %v555
    %v711 = vpack.c.b16 %v558, %v557
    %v712 = vpack.c.b16 %v560, %v559
    %v713 = vpack.c.b16 %v562, %v561
    %v714 = vpack.c.b16 %v564, %v563
    %v715 = vpack.c.b16 %v566, %v565
    %v716 = vpack.c.b16 %v568, %v567
    %v717 = vpack.c.b16 %v570, %v569
    %v718 = vpack.c.b16 %v572, %v571
    %v719 = vpack.c.b16 %v574, %v573
    %v720 = vpack.c.b16 %v576, %v575
    %v721 = vpack.c.b16 %v578, %v577
    %v722 = vpack.c.b16 %v580, %v579
    %v723 = vpack.c.b16 %v582, %v581
    %v724 = vpack.c.b16 %v584, %v583
    %v725 = vpack.c.b16 %v586, %v585
    %v726 = vpack.c.b16 %v588, %v587
    %v727 = vpack.c.b16 %v590, %v589
    %v728 = vpack.c.b16 %v592, %v591
    %v729 = vpack.c.b16 %v594, %v593
    %v730 = vpack.c.b16 %v596, %v595
    %v731 = vpack.c.b16 %v598, %v597
    %v732 = vpack.c.b16 %v600, %v599
    %v733 = vpack.c.b16 %v602, %v601
    %v734 = vpack.c.b16 %v604, %v603
    %v735 = vpack.c.b16 %v606, %v605
    %v736 = vpack.c.b16 %v608, %v607
    %v737 = vpack.c.b16 %v610, %v609
    %v738 = vpack.c.b16 %v612, %v611
    %v739 = vpack.c.b16 %v614, %v613
    %v740 = vpack.c.b16 %v616, %v615
    %v741 = vpack.c.b16 %v618, %v617
    %v742 = vpack.c.b16 %v620, %v619
    %v743 = vpack.c.b16 %v622, %v621
    %v744 = vpack.c.b16 %v624, %v623
    %v745 = vpack.c.b16 %v626, %v625
    %v746 = vpack.c.b16 %v628, %v627
    %v747 = vpack.c.b16 %v630, %v629
    %v748 = vpack.c.b16 %v632, %v631
    %v749 = vpack.c.b16 %v634, %v633
    %v750 = vpack.c.b16 %v636, %v635
    %v751 = vpack.c.b16 %v638, %v637
    %v752 = vpack.c.b16 %v640, %v639
    %v753 = vpack.c.b16 %v642, %v641
    %v754 = vpack.c.b16 %v644, %v643
    %v755 = vpack.c.b16 %v646, %v645
    %v756 = vpack.c.b16 %v648, %v647
    %v757 = vpack.c.b16 %v650, %v649
    %v758 = vpack.c.b16 %v652, %v651
    %v759 = vpack.c.b16 %v654, %v653
    %v760 = vpack.c.b16 %v656, %v655
    %v761 = vpack.c.b16 %v658, %v657
    %v762 = vpack.c.b16 %v660, %v659
    %v763 = vpack.c.b16 %v662, %v661
    %v764 = vpack.c.b16 %v664, %v663
    %v765 = vpack.c.b16 %v666, %v665
    %v766 = vpack.c.b16 %v668, %v667
    %vm865 = vcmask 261120
    %v867 = vsel %vm865, %v73, 0
    %869 = vmatprep.subr.bf16.mxu0 0
    %870 = vmatpush1.bf16.msra.mxu0 %v669
    %871 = vmatprep.subr.bf16.mxu0 0
    %872 = vmatpush1.bf16.msra.mxu0 %v670
    %873 = vmatprep.subr.bf16.mxu0 0
    %874 = vmatpush1.bf16.msra.mxu0 %v671
    %875 = vmatprep.subr.bf16.mxu0 0
    %876 = vmatpush1.bf16.msra.mxu0 %v672
    %877 = vmatprep.subr.bf16.mxu0 0
    %878 = vmatpush1.bf16.msra.mxu0 %v673
    %879 = vmatprep.subr.bf16.mxu0 0
    %880 = vmatpush1.bf16.msra.mxu0 %v674
    %881 = vmatprep.subr.bf16.mxu0 0
    %882 = vmatpush1.bf16.msra.mxu0 %v675
    %883 = vmatprep.subr.bf16.mxu0 0
    %884 = vmatpush1.bf16.msra.mxu0 %v676
    %885 = vmatprep.subr.bf16.mxu0 0
    %886 = vmatpush1.bf16.msra.mxu0 %v677
    %887 = vmatprep.subr.bf16.mxu0 0
    %888 = vmatpush1.bf16.msra.mxu0 %v678
    %889 = vmatprep.subr.bf16.mxu0 0
    %890 = vmatpush1.bf16.msra.mxu0 %v679
    %891 = vmatprep.subr.bf16.mxu0 0
    %892 = vmatpush1.bf16.msra.mxu0 %v680
    %893 = vmatprep.subr.bf16.mxu0 0
    %894 = vmatpush1.bf16.msra.mxu0 %v681
    %895 = vmatprep.subr.bf16.mxu0 0
    %896 = vmatpush1.bf16.msra.mxu0 %v682
    %897 = vmatprep.subr.bf16.mxu0 0
    %898 = vmatpush1.bf16.msra.mxu0 %v683
    %899 = vmatprep.subr.bf16.mxu0 0
    %900 = vmatpush1.bf16.msra.mxu0 %v684
    %901 = vmatprep.mubr.bf16.mxu0 %v62
    %902 = vmatmul.mubr.bf16.gmra.mrb[0].mxu0 %v61
    %v903 = vpop.f32.mrb[0].mxu0
    %v904 = vadd.f32 %v275, %v903
    %v905 = vpop.f32.mrb[0].mxu0
    %v906 = vpop.f32.mrb[0].mxu0
    %v907 = vpop.f32.mrb[0].mxu0
    %908 = vdwg.mxu0
    %909 = vmatprep.subr.bf16.mxu0 0
    %910 = vmatpush1.bf16.msra.mxu0 %v685
    %911 = vmatprep.subr.bf16.mxu0 0
    %912 = vmatpush1.bf16.msra.mxu0 %v686
    %913 = vmatprep.subr.bf16.mxu0 0
    %914 = vmatpush1.bf16.msra.mxu0 %v687
    %915 = vmatprep.subr.bf16.mxu0 0
    %916 = vmatpush1.bf16.msra.mxu0 %v688
    %917 = vmatprep.subr.bf16.mxu0 0
    %918 = vmatpush1.bf16.msra.mxu0 %v689
    %919 = vmatprep.subr.bf16.mxu0 0
    %920 = vmatpush1.bf16.msra.mxu0 %v690
    %921 = vmatprep.subr.bf16.mxu0 0
    %922 = vmatpush1.bf16.msra.mxu0 %v691
    %923 = vmatprep.subr.bf16.mxu0 0
    %924 = vmatpush1.bf16.msra.mxu0 %v692
    %925 = vmatprep.subr.bf16.mxu0 0
    %926 = vmatpush1.bf16.msra.mxu0 %v693
    %927 = vmatprep.subr.bf16.mxu0 0
    %928 = vmatpush1.bf16.msra.mxu0 %v694
    %929 = vmatprep.subr.bf16.mxu0 0
    %930 = vmatpush1.bf16.msra.mxu0 %v695
    %931 = vmatprep.subr.bf16.mxu0 0
    %932 = vmatpush1.bf16.msra.mxu0 %v696
    %933 = vmatprep.subr.bf16.mxu0 0
    %934 = vmatpush1.bf16.msra.mxu0 %v697
    %935 = vmatprep.subr.bf16.mxu0 0
    %936 = vmatpush1.bf16.msra.mxu0 %v698
    %937 = vmatprep.subr.bf16.mxu0 0
    %938 = vmatpush1.bf16.msra.mxu0 %v699
    %939 = vmatprep.subr.bf16.mxu0 0
    %940 = vmatpush1.bf16.msra.mxu0 %v700
    %941 = vmatprep.mubr.bf16.mxu0 %v64
    %942 = vmatmul.mubr.bf16.gmra.mrb[0].mxu0 %v63
    %v943 = vpop.f32.mrb[0].mxu0
    %v944 = vadd.f32 %v904, %v943
    %v945 = vpop.f32.mrb[0].mxu0
    %v946 = vpop.f32.mrb[0].mxu0
    %v947 = vpop.f32.mrb[0].mxu0
    %948 = vdwg.mxu0
    %949 = vmatprep.subr.bf16.mxu0 0
    %950 = vmatpush1.bf16.msra.mxu0 %v701
    %951 = vmatprep.subr.bf16.mxu0 0
    %952 = vmatpush1.bf16.msra.mxu0 %v702
    %953 = vmatprep.subr.bf16.mxu0 0
    %954 = vmatpush1.bf16.msra.mxu0 %v703
    %955 = vmatprep.subr.bf16.mxu0 0
    %956 = vmatpush1.bf16.msra.mxu0 %v704
    %957 = vmatprep.subr.bf16.mxu0 0
    %958 = vmatpush1.bf16.msra.mxu0 %v705
    %959 = vmatprep.subr.bf16.mxu0 0
    %960 = vmatpush1.bf16.msra.mxu0 %v706
    %961 = vmatprep.subr.bf16.mxu0 0
    %962 = vmatpush1.bf16.msra.mxu0 %v707
    %963 = vmatprep.subr.bf16.mxu0 0
    %964 = vmatpush1.bf16.msra.mxu0 %v708
    %965 = vmatprep.subr.bf16.mxu0 0
    %966 = vmatpush1.bf16.msra.mxu0 %v709
    %967 = vmatprep.subr.bf16.mxu0 0
    %968 = vmatpush1.bf16.msra.mxu0 %v710
    %969 = vmatprep.subr.bf16.mxu0 0
    %970 = vmatpush1.bf16.msra.mxu0 %v711
    %971 = vmatprep.subr.bf16.mxu0 0
    %972 = vmatpush1.bf16.msra.mxu0 %v712
    %973 = vmatprep.subr.bf16.mxu0 0
    %974 = vmatpush1.bf16.msra.mxu0 %v713
    %975 = vmatprep.subr.bf16.mxu0 0
    %976 = vmatpush1.bf16.msra.mxu0 %v714
    %977 = vmatprep.subr.bf16.mxu0 0
    %978 = vmatpush1.bf16.msra.mxu0 %v715
    %979 = vmatprep.subr.bf16.mxu0 0
    %980 = vmatpush1.bf16.msra.mxu0 %v716
    %981 = vmatprep.mubr.bf16.mxu0 %v66
    %982 = vmatmul.mubr.bf16.gmra.mrb[0].mxu0 %v65
    %v983 = vpop.f32.mrb[0].mxu0
    %v984 = vadd.f32 %v944, %v983
    %v985 = vpop.f32.mrb[0].mxu0
    %v986 = vpop.f32.mrb[0].mxu0
    %v987 = vpop.f32.mrb[0].mxu0
    %988 = vdwg.mxu0
    %989 = vmatprep.subr.bf16.mxu0 0
    %990 = vmatpush1.bf16.msra.mxu0 %v717
    %991 = vmatprep.subr.bf16.mxu0 0
    %992 = vmatpush1.bf16.msra.mxu0 %v718
    %993 = vmatprep.subr.bf16.mxu0 0
    %994 = vmatpush1.bf16.msra.mxu0 %v719
    %995 = vmatprep.subr.bf16.mxu0 0
    %996 = vmatpush1.bf16.msra.mxu0 %v720
    %997 = vmatprep.subr.bf16.mxu0 0
    %998 = vmatpush1.bf16.msra.mxu0 %v721
    %999 = vmatprep.subr.bf16.mxu0 0
    %1000 = vmatpush1.bf16.msra.mxu0 %v722
    %1001 = vmatprep.subr.bf16.mxu0 0
    %1002 = vmatpush1.bf16.msra.mxu0 %v723
    %1003 = vmatprep.subr.bf16.mxu0 0
    %1004 = vmatpush1.bf16.msra.mxu0 %v724
    %1005 = vmatprep.subr.bf16.mxu0 0
    %1006 = vmatpush1.bf16.msra.mxu0 %v725
    %1007 = vmatprep.subr.bf16.mxu0 0
    %1008 = vmatpush1.bf16.msra.mxu0 %v726
    %1009 = vmatprep.subr.bf16.mxu0 0
    %1010 = vmatpush1.bf16.msra.mxu0 %v727
    %1011 = vmatprep.subr.bf16.mxu0 0
    %1012 = vmatpush1.bf16.msra.mxu0 %v728
    %1013 = vmatprep.subr.bf16.mxu0 0
    %1014 = vmatpush1.bf16.msra.mxu0 %v729
    %1015 = vmatprep.subr.bf16.mxu0 0
    %1016 = vmatpush1.bf16.msra.mxu0 %v730
    %1017 = vmatprep.subr.bf16.mxu0 0
    %1018 = vmatpush1.bf16.msra.mxu0 %v731
    %1019 = vmatprep.subr.bf16.mxu0 0
    %1020 = vmatpush1.bf16.msra.mxu0 %v732
    %1021 = vmatprep.mubr.bf16.mxu0 %v68
    %1022 = vmatmul.mubr.bf16.gmra.mrb[0].mxu0 %v67
    %v1023 = vpop.f32.mrb[0].mxu0
    %v1024 = vadd.f32 %v984, %v1023
    %v1025 = vpop.f32.mrb[0].mxu0
    %v1026 = vpop.f32.mrb[0].mxu0
    %v1027 = vpop.f32.mrb[0].mxu0
    %1028 = vdwg.mxu0
    %1029 = vmatprep.subr.bf16.mxu0 0
    %1030 = vmatpush1.bf16.msra.mxu0 %v733
    %1031 = vmatprep.subr.bf16.mxu0 0
    %1032 = vmatpush1.bf16.msra.mxu0 %v734
    %1033 = vmatprep.subr.bf16.mxu0 0
    %1034 = vmatpush1.bf16.msra.mxu0 %v735
    %1035 = vmatprep.subr.bf16.mxu0 0
    %1036 = vmatpush1.bf16.msra.mxu0 %v736
    %1037 = vmatprep.subr.bf16.mxu0 0
    %1038 = vmatpush1.bf16.msra.mxu0 %v737
    %1039 = vmatprep.subr.bf16.mxu0 0
    %1040 = vmatpush1.bf16.msra.mxu0 %v738
    %1041 = vmatprep.subr.bf16.mxu0 0
    %1042 = vmatpush1.bf16.msra.mxu0 %v739
    %1043 = vmatprep.subr.bf16.mxu0 0
    %1044 = vmatpush1.bf16.msra.mxu0 %v740
    %1045 = vmatprep.subr.bf16.mxu0 0
    %1046 = vmatpush1.bf16.msra.mxu0 %v741
    %1047 = vmatprep.subr.bf16.mxu0 0
    %1048 = vmatpush1.bf16.msra.mxu0 %v742
    %1049 = vmatprep.subr.bf16.mxu0 0
    %1050 = vmatpush1.bf16.msra.mxu0 %v743
    %1051 = vmatprep.subr.bf16.mxu0 0
    %1052 = vmatpush1.bf16.msra.mxu0 %v744
    %1053 = vmatprep.subr.bf16.mxu0 0
    %1054 = vmatpush1.bf16.msra.mxu0 %v745
    %1055 = vmatprep.subr.bf16.mxu0 0
    %1056 = vmatpush1.bf16.msra.mxu0 %v746
    %1057 = vmatprep.subr.bf16.mxu0 0
    %1058 = vmatpush1.bf16.msra.mxu0 %v747
    %1059 = vmatprep.subr.bf16.mxu0 0
    %1060 = vmatpush1.bf16.msra.mxu0 %v748
    %1061 = vmatprep.mubr.bf16.mxu0 %v70
    %1062 = vmatmul.mubr.bf16.gmra.mrb[0].mxu0 %v69
    %v1063 = vpop.f32.mrb[0].mxu0
    %v1064 = vadd.f32 %v1024, %v1063
    %v1065 = vpop.f32.mrb[0].mxu0
    %v1066 = vpop.f32.mrb[0].mxu0
    %v1067 = vpop.f32.mrb[0].mxu0
    %1068 = vdwg.mxu0
    %1069 = vmatprep.subr.bf16.mxu0 0
    %1070 = vmatpush1.bf16.msra.mxu0 %v749
    %1071 = vmatprep.subr.bf16.mxu0 0
    %1072 = vmatpush1.bf16.msra.mxu0 %v750
    %1073 = vmatprep.subr.bf16.mxu0 0
    %1074 = vmatpush1.bf16.msra.mxu0 %v751
    %1075 = vmatprep.subr.bf16.mxu0 0
    %1076 = vmatpush1.bf16.msra.mxu0 %v752
    %1077 = vmatprep.subr.bf16.mxu0 0
    %1078 = vmatpush1.bf16.msra.mxu0 %v753
    %1079 = vmatprep.subr.bf16.mxu0 0
    %1080 = vmatpush1.bf16.msra.mxu0 %v754
    %1081 = vmatprep.subr.bf16.mxu0 0
    %1082 = vmatpush1.bf16.msra.mxu0 %v755
    %1083 = vmatprep.subr.bf16.mxu0 0
    %1084 = vmatpush1.bf16.msra.mxu0 %v756
    %1085 = vmatprep.subr.bf16.mxu0 0
    %1086 = vmatpush1.bf16.msra.mxu0 %v757
    %1087 = vmatprep.subr.bf16.mxu0 0
    %1088 = vmatpush1.bf16.msra.mxu0 %v758
    %1089 = vmatprep.subr.bf16.mxu0 0
    %1090 = vmatpush1.bf16.msra.mxu0 %v759
    %1091 = vmatprep.subr.bf16.mxu0 0
    %1092 = vmatpush1.bf16.msra.mxu0 %v760
    %1093 = vmatprep.subr.bf16.mxu0 0
    %1094 = vmatpush1.bf16.msra.mxu0 %v761
    %1095 = vmatprep.subr.bf16.mxu0 0
    %1096 = vmatpush1.bf16.msra.mxu0 %v762
    %1097 = vmatprep.subr.bf16.mxu0 0
    %1098 = vmatpush1.bf16.msra.mxu0 %v763
    %1099 = vmatprep.subr.bf16.mxu0 0
    %1100 = vmatpush1.bf16.msra.mxu0 %v764
    %1101 = vmatprep.mubr.bf16.mxu0 %v72
    %1102 = vmatmul.mubr.bf16.gmra.mrb[0].mxu0 %v71
    %v1103 = vpop.f32.mrb[0].mxu0
    %v1104 = vadd.f32 %v1064, %v1103
    %v1105 = vpop.f32.mrb[0].mxu0
    %v1106 = vpop.f32.mrb[0].mxu0
    %v1107 = vpop.f32.mrb[0].mxu0
    %1108 = vdwg.mxu0
    %1109 = vmatprep.subr.bf16.mxu0 0
    %1110 = vmatpush1.bf16.msra.mxu0 %v765
    %1111 = vmatprep.subr.bf16.mxu0 0
    %1112 = vmatpush1.bf16.msra.mxu0 %v766
    %1113 = vmatprep.subr.bf16.mxu0 0
    %1114 = vmatpush1.bf16.msra.mxu0 0
    %1115 = vmatprep.subr.bf16.mxu0 0
    %1116 = vmatpush1.bf16.msra.mxu0 0
    %1117 = vmatprep.subr.bf16.mxu0 0
    %1118 = vmatpush1.bf16.msra.mxu0 0
    %1119 = vmatprep.subr.bf16.mxu0 0
    %1120 = vmatpush1.bf16.msra.mxu0 0
    %1121 = vmatprep.subr.bf16.mxu0 0
    %1122 = vmatpush1.bf16.msra.mxu0 0
    %1123 = vmatprep.subr.bf16.mxu0 0
    %1124 = vmatpush1.bf16.msra.mxu0 0
    %1125 = vmatprep.subr.bf16.mxu0 0
    %1126 = vmatpush1.bf16.msra.mxu0 0
    %1127 = vmatprep.subr.bf16.mxu0 0
    %1128 = vmatpush1.bf16.msra.mxu0 0
    %1129 = vmatprep.subr.bf16.mxu0 0
    %1130 = vmatpush1.bf16.msra.mxu0 0
    %1131 = vmatprep.subr.bf16.mxu0 0
    %1132 = vmatpush1.bf16.msra.mxu0 0
    %1133 = vmatprep.subr.bf16.mxu0 0
    %1134 = vmatpush1.bf16.msra.mxu0 0
    %1135 = vmatprep.subr.bf16.mxu0 0
    %1136 = vmatpush1.bf16.msra.mxu0 0
    %1137 = vmatprep.subr.bf16.mxu0 0
    %1138 = vmatpush1.bf16.msra.mxu0 0
    %1139 = vmatprep.subr.bf16.mxu0 0
    %1140 = vmatpush1.bf16.msra.mxu0 0
    %1141 = vmatprep.mubr.bf16.mxu0 0
    %1142 = vmatmul.mubr.bf16.gmra.mrb[0].mxu0 %v867
    %v1143 = vpop.f32.mrb[0].mxu0
    %v1144 = vadd.f32 %v1104, %v1143
    %v1145 = vpop.f32.mrb[0].mxu0
    %v1146 = vpop.f32.mrb[0].mxu0
    %v1147 = vpop.f32.mrb[0].mxu0
    %1148 = vdwg.mxu0
    %v1149 = vxor.u32 %v1144, 2147483648
    %v1150 = vmul.f32 %v1149, 1.442695
    %v1151 = vpow.pop %v1150
    %v1152 = vadd.f32 %v1151, 1.0
    %v1153 = vrcp.pop %v1152
    %v1154 = vmul.f32 1.0, %v1153
    %v1155 = vpack.c.bf16 %v1154, %v1154
    %v1156 = vld [vmem:[%s3] sm:$0xf]
    %v1157 = vld [vmem:[%s3 + $0x4] sm:$0xf]
    %v1158 = vld [vmem:[%s3 + $0x8] sm:$0xf]
    %v1159 = vld [vmem:[%s3 + $0xc] sm:$0xf]
    %v1160 = vld [vmem:[%s3 + $0x10] sm:$0xf]
    %v1161 = vld [vmem:[%s3 + $0x14] sm:$0xf]
    %v1162 = vld [vmem:[%s3 + $0x18] sm:$0xf]
    %v1163 = vld [vmem:[%s3 + $0x1c] sm:$0xf]
    %v1164 = vld [vmem:[%s3 + $0x20] sm:$0xf]
    %v1165 = vld [vmem:[%s3 + $0x24] sm:$0xf]
    %v1166 = vld [vmem:[%s3 + $0x28] sm:$0xf]
    %v1167 = vld [vmem:[%s3 + $0x2c] sm:$0xf]
    %v1168 = vld [vmem:[%s3 + $0x30] sm:$0xf]
    %v1169 = vld [vmem:[%s3 + $0x34] sm:$0xf]
    %v1170 = vld [vmem:[%s3 + $0x38] sm:$0xf]
    %v1171 = vld [vmem:[%s3 + $0x3c] sm:$0xf]
    %v1172 = vld [vmem:[%s4] sm:$0x1]
    %v1174 = vlaneseq
    %v1175 = vshrl.u32 %v1174, 7
    %v1176 = vsub.s32 0, %v1175
    %v1177 = vrot.slane %v1172, %v1176
    %v1195 = vunpack.c.l.b16 %v1156
    %v1196 = vunpack.c.l.b16 %v1157
    %v1197 = vunpack.c.l.b16 %v1158
    %v1198 = vunpack.c.l.b16 %v1159
    %v1199 = vunpack.c.l.b16 %v1160
    %v1200 = vunpack.c.l.b16 %v1161
    %v1201 = vunpack.c.l.b16 %v1162
    %v1202 = vunpack.c.l.b16 %v1163
    %v1203 = vunpack.c.l.b16 %v1164
    %v1204 = vunpack.c.l.b16 %v1165
    %v1205 = vunpack.c.l.b16 %v1166
    %v1206 = vunpack.c.l.b16 %v1167
    %v1207 = vunpack.c.l.b16 %v1168
    %v1208 = vunpack.c.l.b16 %v1169
    %v1209 = vunpack.c.l.b16 %v1170
    %v1210 = vunpack.c.l.b16 %v1171
    %v1211 = vpack.c.b16 %v1196, %v1195
    %v1212 = vpack.c.b16 %v1198, %v1197
    %v1213 = vpack.c.b16 %v1200, %v1199
    %v1214 = vpack.c.b16 %v1202, %v1201
    %v1215 = vpack.c.b16 %v1204, %v1203
    %v1216 = vpack.c.b16 %v1206, %v1205
    %v1217 = vpack.c.b16 %v1208, %v1207
    %v1218 = vpack.c.b16 %v1210, %v1209
    %1227 = vmatprep.subr.bf16.mxu0 0
    %1228 = vmatpush1.bf16.msra.mxu0 %v1211
    %1229 = vmatprep.subr.bf16.mxu0 0
    %1230 = vmatpush1.bf16.msra.mxu0 %v1212
    %1231 = vmatprep.subr.bf16.mxu0 0
    %1232 = vmatpush1.bf16.msra.mxu0 %v1213
    %1233 = vmatprep.subr.bf16.mxu0 0
    %1234 = vmatpush1.bf16.msra.mxu0 %v1214
    %1235 = vmatprep.subr.bf16.mxu0 0
    %1236 = vmatpush1.bf16.msra.mxu0 %v1215
    %1237 = vmatprep.subr.bf16.mxu0 0
    %1238 = vmatpush1.bf16.msra.mxu0 %v1216
    %1239 = vmatprep.subr.bf16.mxu0 0
    %1240 = vmatpush1.bf16.msra.mxu0 %v1217
    %1241 = vmatprep.subr.bf16.mxu0 0
    %1242 = vmatpush1.bf16.msra.mxu0 %v1218
    %1243 = vmatprep.subr.bf16.mxu0 0
    %1244 = vmatpush1.bf16.msra.mxu0 0
    %1245 = vmatprep.subr.bf16.mxu0 0
    %1246 = vmatpush1.bf16.msra.mxu0 0
    %1247 = vmatprep.subr.bf16.mxu0 0
    %1248 = vmatpush1.bf16.msra.mxu0 0
    %1249 = vmatprep.subr.bf16.mxu0 0
    %1250 = vmatpush1.bf16.msra.mxu0 0
    %1251 = vmatprep.subr.bf16.mxu0 0
    %1252 = vmatpush1.bf16.msra.mxu0 0
    %1253 = vmatprep.subr.bf16.mxu0 0
    %1254 = vmatpush1.bf16.msra.mxu0 0
    %1255 = vmatprep.subr.bf16.mxu0 0
    %1256 = vmatpush1.bf16.msra.mxu0 0
    %1257 = vmatprep.subr.bf16.mxu0 0
    %1258 = vmatpush1.bf16.msra.mxu0 0
    %1259 = vmatprep.mubr.bf16.mxu0 0
    %1260 = vmatmul.mubr.bf16.gmra.mrb[0].mxu0 %v1155
    %v1261 = vpop.f32.mrb[0].mxu0
    %v1262 = vadd.f32 %v1177, %v1261
    %v1263 = vpop.f32.mrb[0].mxu0
    %v1264 = vpop.f32.mrb[0].mxu0
    %v1265 = vpop.f32.mrb[0].mxu0
    %1266 = vdwg.mxu0
    %v1267 = vxor.u32 %v1262, 2147483648
    %v1268 = vmul.f32 %v1267, 1.442695
    %v1269 = vpow.pop %v1268
    %v1270 = vadd.f32 %v1269, 1.0
    %v1271 = vrcp.pop %v1270
    %v1272 = vmul.f32 1.0, %v1271
    %1273 = vst.msk [vmem:[#allocation7] sm:$0xff] %vm865, %v1272
    // Predicated region
    $region30: #{encoder_forward.1} parent=1 // pred_check
      _
    $region31: #{encoder_forward.1} parent=1 // pred_check_branch
      %1275 = sbr.rel (0) target = $region33
    $region32: #{encoder_forward.1} parent=1 // pred_region
      %s1277 = ssub.s32 128, 128
      %1278 = vsyncadd [#allocation4], %s1277
      %s1280 = sshll.u32 [#allocation7], 4
      %s1281 = int_to_ptr.vmem [resolvable:$true] %s1280
      %1283 = dma.vmem_to_hbm [thread:$0]  %s1281, 128, %s5, [#allocation4]
    $region33: #{encoder_forward.1} parent=1 // pred_fallthru
      _
    // Predicated region
    $region34: #{encoder_forward.1} parent=1 // pred_check
      _
    $region35: #{encoder_forward.1} parent=1 // pred_check_branch
      %1285 = sbr.rel (0) target = $region37
    $region36: #{encoder_forward.1} parent=1 // pred_region
      %1286 = dma.done [#allocation4], 128
    $region37: #{encoder_forward.1} parent=1 // pred_fallthru
      _
    %1287 = vsyncpa [#allocation3], 1
    %1288 = vsyncpa [#allocation6], 1
    %1289 = vsyncpa [#allocation4], 1

</llo_original>
